<compile_context>
chip_gen: v7x
topology: tpu7x:2x2x1
jax: 0.10.0
libtpu: 0.0.40
codegen_flags: <defaults>
</compile_context>

<pallas_src>
import functools

import jax
import jax.numpy as jnp
from jax.experimental import pallas as pl
from jax.experimental.pallas import tpu as pltpu

LANE = 128


def _round_up(x, m):
    return (x + m - 1) // m * m


def icm_kernel(sp_ref, sn_ref, act_ref,
               w_enc_ref, b_enc_ref,
               w1_ref, b1_ref,
               w2_ref, b2_ref,
               out_ref, rowsse_ref, *, valid_rows):
    tb = sp_ref.shape[0]
    E = w_enc_ref.shape[1]
    bf = jnp.bfloat16

    # --- Encoder: two K=S matmuls against the resident bf16 weights.
    f_prev = jnp.maximum(
        jnp.dot(sp_ref[...].astype(bf), w_enc_ref[...],
                preferred_element_type=jnp.float32) + b_enc_ref[...], 0.0)
    f_next = jnp.maximum(
        jnp.dot(sn_ref[...].astype(bf), w_enc_ref[...],
                preferred_element_type=jnp.float32) + b_enc_ref[...], 0.0)

    # --- Fused first layers (forward + inverse model):
    #     [f_prev | act | f_next] (tb, E+A_pad+E) @ w1 (E+A_pad+E, 2E)
    x1 = jnp.concatenate(
        [f_prev.astype(bf), act_ref[...], f_next.astype(bf)], axis=-1)
    h = jnp.maximum(
        jnp.dot(x1, w1_ref[...], preferred_element_type=jnp.float32)
        + b1_ref[...], 0.0)                              # (tb, 2E) = [h_f | h_i]

    # --- Fused second layers (block-diagonal): (tb, 2E) @ (2E, E+A_pad)
    out = (jnp.dot(h.astype(bf), w2_ref[...],
                   preferred_element_type=jnp.float32) + b2_ref[...])
    out_ref[...] = out                                   # [pred | logits], one lane-dense store

    # --- Partial reward: per-row SSE of (pred - f_next); mask padded rows.
    row = (pl.program_id(0) * tb
           + jax.lax.broadcasted_iota(jnp.int32, (tb, 1), 0))
    valid = (row < valid_rows).astype(jnp.float32)
    diff = out[:, :E] - f_next
    rowsse_ref[...] = jnp.sum(diff * diff, axis=-1, keepdims=True) * valid


def icm_forward(state_prev, state_next, action_onehot, params, *, tb=None):
    B, S = state_prev.shape
    A = action_onehot.shape[1]
    E = params["w_enc"].shape[1]
    A_pad = params["b2"].shape[1] - E
    EA = E + A_pad

    if tb is None:
        # 16-aligned tiles (native bf16 (16,128) packing), capped at 512 and by
        # a ~24 MiB budget for the double-buffered f32 state blocks (v7x VMEM).
        per_row_bytes = 2 * 2 * S * 4
        cap = max(16, (24 * 1024 * 1024 // per_row_bytes) // 16 * 16)
        tb = max(16, min(_round_up(max(B, 1), 16), 512, cap))
        if _round_up(B, tb) // tb == 1 and tb >= 32:
            tb = _round_up(tb // 2, 16)      # nb >= 2 keeps both v7x TCs busy
    Bp = _round_up(B, tb)
    nb = Bp // tb

    def pad_rows(x, width=None, dtype=None):
        pr = Bp - x.shape[0]
        pc = 0 if width is None else width - x.shape[1]
        x = jnp.pad(x, ((0, pr), (0, pc)))
        return x if dtype is None else x.astype(dtype)

    sp = pad_rows(state_prev)                            # stays f32; cast in-kernel
    sn = pad_rows(state_next)
    act = pad_rows(action_onehot, A_pad, jnp.bfloat16)   # lane-pad + exact bf16

    row = lambda i: (i, 0)                 # batch-tiled arrays
    rep = lambda i: (0, 0)                 # resident weights / biases

    in_specs = [
        pl.BlockSpec((tb, S), row),                      # state_prev tile
        pl.BlockSpec((tb, S), row),                      # state_next tile
        pl.BlockSpec((tb, A_pad), row),                  # action one-hot (padded)
        pl.BlockSpec(params["w_enc"].shape, rep),
        pl.BlockSpec(params["b_enc"].shape, rep),
        pl.BlockSpec(params["w1"].shape, rep),
        pl.BlockSpec(params["b1"].shape, rep),
        pl.BlockSpec(params["w2"].shape, rep),
        pl.BlockSpec(params["b2"].shape, rep),
    ]
    out_specs = (
        pl.BlockSpec((tb, EA), row),                     # [pred | logits]
        pl.BlockSpec((tb, 1), row),                      # per-row SSE (masked)
    )
    out_shape = (
        jax.ShapeDtypeStruct((Bp, EA), jnp.float32),
        jax.ShapeDtypeStruct((Bp, 1), jnp.float32),
    )

    out, rowsse = pl.pallas_call(
        functools.partial(icm_kernel, valid_rows=B),
        grid=(nb,),
        in_specs=in_specs,
        out_specs=out_specs,
        out_shape=out_shape,
        compiler_params=pltpu.CompilerParams(
            dimension_semantics=("parallel",)),
    )(sp, sn, act,
      params["w_enc"], params["b_enc"],
      params["w1"], params["b1"],
      params["w2"], params["b2"])

    pred = out[:B, :E]
    logits = out[:B, E:E + A]
    # reward = 0.5 * MSE(pred_next_feat, feat_next), reduction='mean' (scalar).
    # Padded rows were masked in-kernel, so the plain sum over rowsse is exact.
    reward = 0.5 * jnp.sum(rowsse) / (B * E)
    return reward, logits, pred


def init_params(key, state_dim, action_dim, encoding_dim):
    """nn.Linear-style U(-1/sqrt(fan_in), 1/sqrt(fan_in)) init, packed for the
    fused kernel.  Weights stored (in, out) bf16; biases (1, out) f32."""
    E, A, S = encoding_dim, action_dim, state_dim
    A_pad = _round_up(max(A, 1), LANE)

    def linear(key, fan_in, fan_out):
        kw, kb = jax.random.split(key)
        bound = 1.0 / jnp.sqrt(fan_in)
        w = jax.random.uniform(kw, (fan_in, fan_out), jnp.float32, -bound, bound)
        b = jax.random.uniform(kb, (1, fan_out), jnp.float32, -bound, bound)
        return w, b

    keys = jax.random.split(key, 5)
    w_enc, b_enc = linear(keys[0], S, E)
    w_f1, b_f1 = linear(keys[1], E + A, E)     # forward_model layer 1
    w_f2, b_f2 = linear(keys[2], E, E)         # forward_model layer 2
    w_i1, b_i1 = linear(keys[3], 2 * E, E)     # inverse_model layer 1
    w_i2, b_i2 = linear(keys[4], E, A)         # inverse_model layer 2

    # Fused first layer: rows [f_prev | act_pad | f_next], cols [h_f | h_i].
    K1 = E + A_pad + E
    w1 = jnp.zeros((K1, 2 * E), jnp.float32)
    w1 = w1.at[:E, :E].set(w_f1[:E, :])            # f_prev -> h_f
    w1 = w1.at[:E, E:].set(w_i1[:E, :])            # f_prev -> h_i
    w1 = w1.at[E:E + A, :E].set(w_f1[E:, :])       # action -> h_f
    w1 = w1.at[E + A_pad:, E:].set(w_i1[E:, :])    # f_next -> h_i
    b1 = jnp.concatenate([b_f1, b_i1], axis=1)     # (1, 2E)

    # Fused second layer (block-diagonal): [h_f | h_i] -> [pred | logits_pad].
    w2 = jnp.zeros((2 * E, E + A_pad), jnp.float32)
    w2 = w2.at[:E, :E].set(w_f2)
    w2 = w2.at[E:, E:E + A].set(w_i2)
    b2 = jnp.zeros((1, E + A_pad), jnp.float32)
    b2 = b2.at[:, :E].set(b_f2)
    b2 = b2.at[:, E:E + A].set(b_i2)

    bf = jnp.bfloat16
    return {
        "w_enc": w_enc.astype(bf), "b_enc": b_enc,
        "w1": w1.astype(bf), "b1": b1,
        "w2": w2.astype(bf), "b2": b2,
    }


def _unpack(params, action_dim):
    E = params["w_enc"].shape[1]
    A = action_dim
    A_pad = params["b2"].shape[1] - E
    w1, w2 = params["w1"], params["w2"]
    return dict(
        E=E, A=A,
        w_enc=params["w_enc"], b_enc=params["b_enc"],
        w_f1s=w1[:E, :E], w_i1p=w1[:E, E:],
        w_f1a=w1[E:E + A, :E], w_i1n=w1[E + A_pad:, E:],
        b_f1=params["b1"][:, :E], b_i1=params["b1"][:, E:],
        w_f2=w2[:E, :E], b_f2=params["b2"][:, :E],
        w_i2=w2[E:, E:E + A], b_i2=params["b2"][:, E:E + A],
    )


def icm_reference(state_prev, state_next, action_onehot, params, action_dim,
                  *, matmul_dtype):
    """Pure-JAX reference of the PyTorch forward.  matmul_dtype=bf16 mirrors
    the kernel numerics exactly; matmul_dtype=f32 is the full-precision spec."""
    p = _unpack(params, action_dim)
    relu = jax.nn.relu

    def mm(x, w):
        return jnp.dot(x.astype(matmul_dtype), w.astype(matmul_dtype),
                       preferred_element_type=jnp.float32)

    f_prev = relu(mm(state_prev, p["w_enc"]) + p["b_enc"])
    f_next = relu(mm(state_next, p["w_enc"]) + p["b_enc"])
    h_f = relu(mm(f_prev, p["w_f1s"]) + mm(action_onehot, p["w_f1a"]) + p["b_f1"])
    pred = mm(h_f, p["w_f2"]) + p["b_f2"]
    h_i = relu(mm(f_prev, p["w_i1p"]) + mm(f_next, p["w_i1n"]) + p["b_i1"])
    logits = mm(h_i, p["w_i2"]) + p["b_i2"]
    reward = 0.5 * jnp.mean((pred - f_next) ** 2)
    return reward, logits, pred


if __name__ == "__main__":
    B, STATE_DIM, ACTION_DIM, ENC_DIM = 8, 32, 8, 128

    key = jax.random.PRNGKey(0)
    k_sp, k_sn, k_a, k_p = jax.random.split(key, 4)

    state_prev = jax.random.normal(k_sp, (B, STATE_DIM), jnp.float32)
    state_next = jax.random.normal(k_sn, (B, STATE_DIM), jnp.float32)
    action_idx = jax.random.randint(k_a, (B,), 0, ACTION_DIM)
    action_onehot = jax.nn.one_hot(action_idx, ACTION_DIM, dtype=jnp.float32)

    params = init_params(k_p, STATE_DIM, ACTION_DIM, ENC_DIM)

    reward, logits, pred = jax.block_until_ready(
        icm_forward(state_prev, state_next, action_onehot, params))

    # Tight check against the bf16-mirror reference (same math as the kernel).
    r_m, l_m, p_m = icm_reference(state_prev, state_next, action_onehot,
                                  params, ACTION_DIM, matmul_dtype=jnp.bfloat16)
    assert jnp.allclose(reward, r_m, atol=1e-3, rtol=1e-3)
    assert jnp.allclose(logits, l_m, atol=1e-3, rtol=1e-3)
    assert jnp.allclose(pred, p_m, atol=1e-3, rtol=1e-3)

    # Loose sanity check against the full-f32 PyTorch-semantics reference
    # (bf16 matmul inputs lose ~3 decimal digits, accumulation stays f32).
    r_f, l_f, p_f = icm_reference(state_prev, state_next, action_onehot,
                                  params, ACTION_DIM, matmul_dtype=jnp.float32)
    assert jnp.allclose(reward, r_f, atol=5e-2, rtol=5e-2)
    assert jnp.allclose(logits, l_f, atol=5e-2, rtol=5e-2)
    assert jnp.allclose(pred, p_f, atol=5e-2, rtol=5e-2)

    print("KERNEL_OK")
</pallas_src>

<mosaic_0001>
module attributes {stable_mosaic.version = 11 : i64} {
  func.func @icm_kernel(%arg0: i32, %arg1: memref<16x32xf32, #tpu.memory_space<vmem>>, %arg2: memref<16x32xf32, #tpu.memory_space<vmem>>, %arg3: memref<16x128xbf16, #tpu.memory_space<vmem>>, %arg4: memref<32x128xbf16, #tpu.memory_space<vmem>>, %arg5: memref<1x128xf32, #tpu.memory_space<vmem>>, %arg6: memref<384x256xbf16, #tpu.memory_space<vmem>>, %arg7: memref<1x256xf32, #tpu.memory_space<vmem>>, %arg8: memref<256x256xbf16, #tpu.memory_space<vmem>>, %arg9: memref<1x256xf32, #tpu.memory_space<vmem>>, %arg10: memref<16x256xf32, #tpu.memory_space<vmem>>, %arg11: memref<16x1xf32, #tpu.memory_space<vmem>>) attributes {dimension_semantics = [#tpu.dimension_semantics<parallel>], iteration_bounds = array<i64: 1>, scalar_prefetch = 0 : i64, scratch_operands = 0 : i64, tpu.core_type = #tpu.core_type<tc>, window_params = [{transform_indices = @transform_0, window_bounds = array<i64: 16, 32>}, {transform_indices = @transform_1, window_bounds = array<i64: 16, 32>}, {transform_indices = @transform_2, window_bounds = array<i64: 16, 128>}, {pipeline_mode = #tpu.pipeline_mode<synchronous>, transform_indices = @transform_3, window_bounds = array<i64: 32, 128>}, {pipeline_mode = #tpu.pipeline_mode<synchronous>, transform_indices = @transform_4, window_bounds = array<i64: 1, 128>}, {pipeline_mode = #tpu.pipeline_mode<synchronous>, transform_indices = @transform_5, window_bounds = array<i64: 384, 256>}, {pipeline_mode = #tpu.pipeline_mode<synchronous>, transform_indices = @transform_6, window_bounds = array<i64: 1, 256>}, {pipeline_mode = #tpu.pipeline_mode<synchronous>, transform_indices = @transform_7, window_bounds = array<i64: 256, 256>}, {pipeline_mode = #tpu.pipeline_mode<synchronous>, transform_indices = @transform_8, window_bounds = array<i64: 1, 256>}, {transform_indices = @transform_9, window_bounds = array<i64: 16, 256>}, {transform_indices = @transform_10, window_bounds = array<i64: 16, 1>}]} {
    %c0 = arith.constant 0 : index
    %c0_0 = arith.constant 0 : index
    %0 = vector.load %arg1[%c0, %c0_0] : memref<16x32xf32, #tpu.memory_space<vmem>>, vector<16x32xf32>
    %1 = arith.truncf %0 : vector<16x32xf32> to vector<16x32xbf16>
    %c0_1 = arith.constant 0 : index
    %c0_2 = arith.constant 0 : index
    %2 = vector.load %arg4[%c0_1, %c0_2] : memref<32x128xbf16, #tpu.memory_space<vmem>>, vector<32x128xbf16>
    %cst = arith.constant dense<0.000000e+00> : vector<16x128xf32>
    %3 = tpu.matmul %1, %2, %cst {dimension_numbers = #tpu.dot_dimension_numbers<[1], [0], [0], [1], [0, 0, 1, 1], [], []>} : vector<16x32xbf16>, vector<32x128xbf16>, vector<16x128xf32> -> vector<16x128xf32>
    %c0_3 = arith.constant 0 : index
    %c0_4 = arith.constant 0 : index
    %4 = vector.load %arg5[%c0_3, %c0_4] : memref<1x128xf32, #tpu.memory_space<vmem>>, vector<1x128xf32>
    %5 = vector.broadcast %4 : vector<1x128xf32> to vector<16x128xf32>
    %6 = arith.addf %3, %5 : vector<16x128xf32>
    %cst_5 = arith.constant 0.000000e+00 : f32
    %7 = vector.broadcast %cst_5 : f32 to vector<16x128xf32>
    %8 = arith.maximumf %6, %7 : vector<16x128xf32>
    %c0_6 = arith.constant 0 : index
    %c0_7 = arith.constant 0 : index
    %9 = vector.load %arg2[%c0_6, %c0_7] : memref<16x32xf32, #tpu.memory_space<vmem>>, vector<16x32xf32>
    %10 = arith.truncf %9 : vector<16x32xf32> to vector<16x32xbf16>
    %c0_8 = arith.constant 0 : index
    %c0_9 = arith.constant 0 : index
    %11 = vector.load %arg4[%c0_8, %c0_9] : memref<32x128xbf16, #tpu.memory_space<vmem>>, vector<32x128xbf16>
    %cst_10 = arith.constant dense<0.000000e+00> : vector<16x128xf32>
    %12 = tpu.matmul %10, %11, %cst_10 {dimension_numbers = #tpu.dot_dimension_numbers<[1], [0], [0], [1], [0, 0, 1, 1], [], []>} : vector<16x32xbf16>, vector<32x128xbf16>, vector<16x128xf32> -> vector<16x128xf32>
    %c0_11 = arith.constant 0 : index
    %c0_12 = arith.constant 0 : index
    %13 = vector.load %arg5[%c0_11, %c0_12] : memref<1x128xf32, #tpu.memory_space<vmem>>, vector<1x128xf32>
    %14 = vector.broadcast %13 : vector<1x128xf32> to vector<16x128xf32>
    %15 = arith.addf %12, %14 : vector<16x128xf32>
    %cst_13 = arith.constant 0.000000e+00 : f32
    %16 = vector.broadcast %cst_13 : f32 to vector<16x128xf32>
    %17 = arith.maximumf %15, %16 : vector<16x128xf32>
    %18 = arith.truncf %8 : vector<16x128xf32> to vector<16x128xbf16>
    %c0_14 = arith.constant 0 : index
    %c0_15 = arith.constant 0 : index
    %19 = vector.load %arg3[%c0_14, %c0_15] : memref<16x128xbf16, #tpu.memory_space<vmem>>, vector<16x128xbf16>
    %20 = arith.truncf %17 : vector<16x128xf32> to vector<16x128xbf16>
    %21 = tpu.concatenate %18, %19, %20 in 1 : vector<16x128xbf16>, vector<16x128xbf16>, vector<16x128xbf16> -> vector<16x384xbf16>
    %c0_16 = arith.constant 0 : index
    %c0_17 = arith.constant 0 : index
    %22 = vector.load %arg6[%c0_16, %c0_17] : memref<384x256xbf16, #tpu.memory_space<vmem>>, vector<384x256xbf16>
    %cst_18 = arith.constant dense<0.000000e+00> : vector<16x256xf32>
    %23 = tpu.matmul %21, %22, %cst_18 {dimension_numbers = #tpu.dot_dimension_numbers<[1], [0], [0], [1], [0, 0, 1, 1], [], []>} : vector<16x384xbf16>, vector<384x256xbf16>, vector<16x256xf32> -> vector<16x256xf32>
    %c0_19 = arith.constant 0 : index
    %c0_20 = arith.constant 0 : index
    %24 = vector.load %arg7[%c0_19, %c0_20] : memref<1x256xf32, #tpu.memory_space<vmem>>, vector<1x256xf32>
    %25 = vector.broadcast %24 : vector<1x256xf32> to vector<16x256xf32>
    %26 = arith.addf %23, %25 : vector<16x256xf32>
    %cst_21 = arith.constant 0.000000e+00 : f32
    %27 = vector.broadcast %cst_21 : f32 to vector<16x256xf32>
    %28 = arith.maximumf %26, %27 : vector<16x256xf32>
    %29 = arith.truncf %28 : vector<16x256xf32> to vector<16x256xbf16>
    %c0_22 = arith.constant 0 : index
    %c0_23 = arith.constant 0 : index
    %30 = vector.load %arg8[%c0_22, %c0_23] : memref<256x256xbf16, #tpu.memory_space<vmem>>, vector<256x256xbf16>
    %cst_24 = arith.constant dense<0.000000e+00> : vector<16x256xf32>
    %31 = tpu.matmul %29, %30, %cst_24 {dimension_numbers = #tpu.dot_dimension_numbers<[1], [0], [0], [1], [0, 0, 1, 1], [], []>} : vector<16x256xbf16>, vector<256x256xbf16>, vector<16x256xf32> -> vector<16x256xf32>
    %c0_25 = arith.constant 0 : index
    %c0_26 = arith.constant 0 : index
    %32 = vector.load %arg9[%c0_25, %c0_26] : memref<1x256xf32, #tpu.memory_space<vmem>>, vector<1x256xf32>
    %33 = vector.broadcast %32 : vector<1x256xf32> to vector<16x256xf32>
    %34 = arith.addf %31, %33 : vector<16x256xf32>
    %c0_27 = arith.constant 0 : index
    %c0_28 = arith.constant 0 : index
    %35 = vector.load %arg10[%c0_27, %c0_28] : memref<16x256xf32, #tpu.memory_space<vmem>>, vector<16x256xf32>
    tpu.vector_store %arg10[%c0_27, %c0_28], %34 {strides = array<i32>} : memref<16x256xf32, #tpu.memory_space<vmem>>, vector<16x256xf32>,
    %c16_i32 = arith.constant 16 : i32
    %36 = arith.muli %arg0, %c16_i32 : i32
    %37 = tpu.iota {dimensions = array<i32: 0>} : vector<16x1xi32>
    %38 = vector.broadcast %36 : i32 to vector<16x1xi32>
    %39 = arith.addi %38, %37 : vector<16x1xi32>
    %c8_i32 = arith.constant 8 : i32
    %40 = vector.broadcast %c8_i32 : i32 to vector<16x1xi32>
    %41 = arith.cmpi slt, %39, %40 : vector<16x1xi32>
    %42 = arith.extui %41 : vector<16x1xi1> to vector<16x1xi32>
    %43 = arith.sitofp %42 : vector<16x1xi32> to vector<16x1xf32>
    %44 = vector.extract_strided_slice %34 {offsets = [0, 0], sizes = [16, 128], strides = [1, 1]} : vector<16x256xf32> to vector<16x128xf32>
    %45 = arith.subf %44, %17 : vector<16x128xf32>
    %46 = arith.mulf %45, %45 : vector<16x128xf32>
    %cst_29 = arith.constant dense<0.000000e+00> : vector<16xf32>
    %47 = vector.multi_reduction <add>, %46, %cst_29 [1] : vector<16x128xf32> to vector<16xf32>
    %48 = vector.shape_cast %47 : vector<16xf32> to vector<16x1xf32>
    %49 = arith.mulf %48, %43 : vector<16x1xf32>
    %c0_30 = arith.constant 0 : index
    %c0_31 = arith.constant 0 : index
    %50 = vector.load %arg11[%c0_30, %c0_31] : memref<16x1xf32, #tpu.memory_space<vmem>>, vector<16x1xf32>
    tpu.vector_store %arg11[%c0_30, %c0_31], %49 {strides = array<i32>} : memref<16x1xf32, #tpu.memory_space<vmem>>, vector<16x1xf32>,
    return
  }
  func.func @transform_0(%arg0: i32) -> (i32, i32) {
    %c0_i32 = arith.constant 0 : i32
    %c0_i32_0 = arith.constant 0 : i32
    return %arg0, %c0_i32 : i32, i32
  }
  func.func @transform_1(%arg0: i32) -> (i32, i32) {
    %c0_i32 = arith.constant 0 : i32
    %c0_i32_0 = arith.constant 0 : i32
    return %arg0, %c0_i32 : i32, i32
  }
  func.func @transform_2(%arg0: i32) -> (i32, i32) {
    %c0_i32 = arith.constant 0 : i32
    %c0_i32_0 = arith.constant 0 : i32
    return %arg0, %c0_i32 : i32, i32
  }
  func.func @transform_3(%arg0: i32) -> (i32, i32) {
    %c0_i32 = arith.constant 0 : i32
    %c0_i32_0 = arith.constant 0 : i32
    %c0_i32_1 = arith.constant 0 : i32
    return %c0_i32, %c0_i32_0 : i32, i32
  }
  func.func @transform_4(%arg0: i32) -> (i32, i32) {
    %c0_i32 = arith.constant 0 : i32
    %c0_i32_0 = arith.constant 0 : i32
    %c0_i32_1 = arith.constant 0 : i32
    return %c0_i32, %c0_i32_0 : i32, i32
  }
  func.func @transform_5(%arg0: i32) -> (i32, i32) {
    %c0_i32 = arith.constant 0 : i32
    %c0_i32_0 = arith.constant 0 : i32
    %c0_i32_1 = arith.constant 0 : i32
    return %c0_i32, %c0_i32_0 : i32, i32
  }
  func.func @transform_6(%arg0: i32) -> (i32, i32) {
    %c0_i32 = arith.constant 0 : i32
    %c0_i32_0 = arith.constant 0 : i32
    %c0_i32_1 = arith.constant 0 : i32
    return %c0_i32, %c0_i32_0 : i32, i32
  }
  func.func @transform_7(%arg0: i32) -> (i32, i32) {
    %c0_i32 = arith.constant 0 : i32
    %c0_i32_0 = arith.constant 0 : i32
    %c0_i32_1 = arith.constant 0 : i32
    return %c0_i32, %c0_i32_0 : i32, i32
  }
  func.func @transform_8(%arg0: i32) -> (i32, i32) {
    %c0_i32 = arith.constant 0 : i32
    %c0_i32_0 = arith.constant 0 : i32
    %c0_i32_1 = arith.constant 0 : i32
    return %c0_i32, %c0_i32_0 : i32, i32
  }
  func.func @transform_9(%arg0: i32) -> (i32, i32) {
    %c0_i32 = arith.constant 0 : i32
    %c0_i32_0 = arith.constant 0 : i32
    return %arg0, %c0_i32 : i32, i32
  }
  func.func @transform_10(%arg0: i32) -> (i32, i32) {
    %c0_i32 = arith.constant 0 : i32
    %c0_i32_0 = arith.constant 0 : i32
    return %arg0, %c0_i32 : i32, i32
  }
}

</mosaic_0001>

<llo_original>
// kernel: tpu_custom_call.1
$region0: #{tpu_custom_call.1}
  #allocation0 [shape = 'u32[]', space=smem, size = 0x4, offset = 0x4, fixed_abs, tag = 'smem constant byte address 0x4 - core index']
  #allocation1 [shape = 'u32[144,128]{1,0:T(1,128)}', space=vmem, size = 0x12000, scoped, tag = 'internal scratch']
  %s0 = inlined_call_operand.hbm [shape: f32[16,32], index: 0, kind: input, shape index: {}]
  %s1 = inlined_call_operand.hbm [shape: f32[16,32], index: 1, kind: input, shape index: {}]
  %s2 = inlined_call_operand.hbm [shape: bf16[16,128], index: 2, kind: input, shape index: {}]
  %s3 = inlined_call_operand.hbm [shape: bf16[32,128], index: 3, kind: input, shape index: {}]
  %s4 = inlined_call_operand.vmem [shape: f32[1,128], index: 4, kind: input, shape index: {}]
  %s5 = inlined_call_operand.hbm [shape: bf16[384,256], index: 5, kind: input, shape index: {}]
  %s6 = inlined_call_operand.vmem [shape: f32[1,256], index: 6, kind: input, shape index: {}]
  %s7 = inlined_call_operand.hbm [shape: bf16[256,256], index: 7, kind: input, shape index: {}]
  %s8 = inlined_call_operand.vmem [shape: f32[1,256], index: 8, kind: input, shape index: {}]
  %s9 = inlined_call_operand.hbm [shape: f32[16,256], index: 9, kind: output, shape index: {0}]
  %s10 = inlined_call_operand.vmem [shape: f32[16,1], index: 10, kind: output, shape index: {1}]
  %11 = xla_tuple %s9, %s10
  %s12 = sld [smem:[#allocation0]]
  $region78: #{tpu_custom_call.1} parent=0
    _
  %s14 = ssub.s32 1, %s12
  %s15 = scalar_select 0, %s14, %s12
  $region1: #{tpu_custom_call.1} parent=0
    #allocation2 [shape = 'u8[8192]{0}', space=vmem, size = 0x2000, scoped, tag = 'input window, operand 0, single buffered']
    #allocation3 [shape = 's32[1]{0}', space=sflag, size = 0x4, scoped, tag = 'scoped memory for tpu_custom_call.1']
    #allocation4 [shape = 's32[1]{0}', space=sflag, size = 0x4, scoped, tag = 'scoped memory for tpu_custom_call.1']
    #allocation5 [shape = 'u8[8192]{0}', space=vmem, size = 0x2000, scoped, tag = 'input window, operand 1, single buffered']
    #allocation6 [shape = 's32[1]{0}', space=sflag, size = 0x4, scoped, tag = 'scoped memory for tpu_custom_call.1']
    #allocation7 [shape = 'u8[4096]{0}', space=vmem, size = 0x1000, scoped, tag = 'input window, operand 2, single buffered']
    #allocation8 [shape = 'u8[8192]{0}', space=vmem, size = 0x2000, scoped, tag = 'input window, operand 3, single buffered']
    #allocation9 [shape = 's32[1]{0}', space=sflag, size = 0x4, scoped, tag = 'scoped memory for tpu_custom_call.1']
    #allocation10 [shape = 'u8[196608]{0}', space=vmem, size = 0x30000, scoped, tag = 'input window, operand 5, single buffered']
    #allocation11 [shape = 'u8[131072]{0}', space=vmem, size = 0x20000, scoped, tag = 'input window, operand 7, single buffered']
    #allocation12 [shape = 's32[1]{0}', space=sflag, size = 0x4, scoped, tag = 'scoped memory for tpu_custom_call.1']
    #allocation13 [shape = 'u8[16384]{0}', space=vmem, size = 0x4000, scoped, tag = 'output window, operand 0, single buffered']
    %16 = vsyncpa [#allocation3], 0
    %17 = vsyncpa [#allocation6], 0
    %18 = vsyncpa [#allocation9], 0
    %19 = vsyncpa [#allocation12], 0
    %20 = vsyncpa [#allocation4], 0
    // Predicated region
    $region2: #{tpu_custom_call.1} parent=1 // pred_check
      _
    $region3: #{tpu_custom_call.1} parent=1 // pred_check_branch
      %22 = sbr.rel (0) target = $region5
    $region4: #{tpu_custom_call.1} parent=1 // pred_region
      %s24 = ssub.s32 256, 256
      %25 = vsyncadd [#allocation3], %s24
      %s26 = sshll.u32 [#allocation2], 4
      %s27 = int_to_ptr.vmem [resolvable:$true] %s26
      %32 = dma.hbm_to_vmem [thread:$0]  %s0, 256, %s27, [#allocation3], 128, 128, 8
    $region5: #{tpu_custom_call.1} parent=1 // pred_fallthru
      _
    // Predicated region
    $region6: #{tpu_custom_call.1} parent=1 // pred_check
      _
    $region7: #{tpu_custom_call.1} parent=1 // pred_check_branch
      %34 = sbr.rel (0) target = $region9
    $region8: #{tpu_custom_call.1} parent=1 // pred_region
      %s36 = ssub.s32 256, 256
      %37 = vsyncadd [#allocation6], %s36
      %s38 = sshll.u32 [#allocation5], 4
      %s39 = int_to_ptr.vmem [resolvable:$true] %s38
      %44 = dma.hbm_to_vmem [thread:$0]  %s1, 256, %s39, [#allocation6], 128, 128, 8
    $region9: #{tpu_custom_call.1} parent=1 // pred_fallthru
      _
    // Predicated region
    $region10: #{tpu_custom_call.1} parent=1 // pred_check
      _
    $region11: #{tpu_custom_call.1} parent=1 // pred_check_branch
      %46 = sbr.rel (0) target = $region13
    $region12: #{tpu_custom_call.1} parent=1 // pred_region
      %s48 = ssub.s32 128, 128
      %49 = vsyncadd [#allocation6], %s48
      %s50 = sshll.u32 [#allocation7], 4
      %s51 = int_to_ptr.vmem [resolvable:$true] %s50
      %56 = dma.hbm_to_vmem [thread:$0]  %s2, 128, %s51, [#allocation6], 64, 64, 4
    $region13: #{tpu_custom_call.1} parent=1 // pred_fallthru
      _
    // Predicated region
    $region14: #{tpu_custom_call.1} parent=1 // pred_check
      _
    $region15: #{tpu_custom_call.1} parent=1 // pred_check_branch
      %58 = sbr.rel (0) target = $region17
    $region16: #{tpu_custom_call.1} parent=1 // pred_region
      %s60 = ssub.s32 256, 256
      %61 = vsyncadd [#allocation9], %s60
      %s62 = sshll.u32 [#allocation8], 4
      %s63 = int_to_ptr.vmem [resolvable:$true] %s62
      %68 = dma.hbm_to_vmem [thread:$0]  %s3, 256, %s63, [#allocation9], 64, 64, 4
    $region17: #{tpu_custom_call.1} parent=1 // pred_fallthru
      _
    // Predicated region
    $region18: #{tpu_custom_call.1} parent=1 // pred_check
      _
    $region19: #{tpu_custom_call.1} parent=1 // pred_check_branch
      %70 = sbr.rel (0) target = $region21
    $region20: #{tpu_custom_call.1} parent=1 // pred_region
      _
    $region21: #{tpu_custom_call.1} parent=1 // pred_fallthru
      _
    // Predicated region
    $region22: #{tpu_custom_call.1} parent=1 // pred_check
      _
    $region23: #{tpu_custom_call.1} parent=1 // pred_check_branch
      %72 = sbr.rel (0) target = $region25
    $region24: #{tpu_custom_call.1} parent=1 // pred_region
      %s74 = ssub.s32 6144, 6144
      %75 = vsyncadd [#allocation9], %s74
      %s76 = sshll.u32 [#allocation10], 4
      %s77 = int_to_ptr.vmem [resolvable:$true] %s76
      %82 = dma.hbm_to_vmem [thread:$0]  %s5, 6144, %s77, [#allocation9], 128, 128, 8
    $region25: #{tpu_custom_call.1} parent=1 // pred_fallthru
      _
    // Predicated region
    $region26: #{tpu_custom_call.1} parent=1 // pred_check
      _
    $region27: #{tpu_custom_call.1} parent=1 // pred_check_branch
      %84 = sbr.rel (0) target = $region29
    $region28: #{tpu_custom_call.1} parent=1 // pred_region
      _
    $region29: #{tpu_custom_call.1} parent=1 // pred_fallthru
      _
    // Predicated region
    $region30: #{tpu_custom_call.1} parent=1 // pred_check
      _
    $region31: #{tpu_custom_call.1} parent=1 // pred_check_branch
      %86 = sbr.rel (0) target = $region33
    $region32: #{tpu_custom_call.1} parent=1 // pred_region
      %s88 = ssub.s32 4096, 4096
      %89 = vsyncadd [#allocation12], %s88
      %s90 = sshll.u32 [#allocation11], 4
      %s91 = int_to_ptr.vmem [resolvable:$true] %s90
      %96 = dma.hbm_to_vmem [thread:$0]  %s7, 4096, %s91, [#allocation12], 128, 128, 8
    $region33: #{tpu_custom_call.1} parent=1 // pred_fallthru
      _
    // Predicated region
    $region34: #{tpu_custom_call.1} parent=1 // pred_check
      _
    $region35: #{tpu_custom_call.1} parent=1 // pred_check_branch
      %98 = sbr.rel (0) target = $region37
    $region36: #{tpu_custom_call.1} parent=1 // pred_region
      _
    $region37: #{tpu_custom_call.1} parent=1 // pred_fallthru
      _
    // Predicated region
    $region38: #{tpu_custom_call.1} parent=1 // pred_check
      _
    $region39: #{tpu_custom_call.1} parent=1 // pred_check_branch
      %100 = sbr.rel (0) target = $region41
    $region40: #{tpu_custom_call.1} parent=1 // pred_region
      %101 = dma.done [#allocation3], 256
    $region41: #{tpu_custom_call.1} parent=1 // pred_fallthru
      _
    // Predicated region
    $region42: #{tpu_custom_call.1} parent=1 // pred_check
      _
    $region43: #{tpu_custom_call.1} parent=1 // pred_check_branch
      %103 = sbr.rel (0) target = $region45
    $region44: #{tpu_custom_call.1} parent=1 // pred_region
      %104 = dma.done [#allocation6], 256
    $region45: #{tpu_custom_call.1} parent=1 // pred_fallthru
      _
    // Predicated region
    $region46: #{tpu_custom_call.1} parent=1 // pred_check
      _
    $region47: #{tpu_custom_call.1} parent=1 // pred_check_branch
      %106 = sbr.rel (0) target = $region49
    $region48: #{tpu_custom_call.1} parent=1 // pred_region
      %107 = dma.done [#allocation6], 128
    $region49: #{tpu_custom_call.1} parent=1 // pred_fallthru
      _
    // Predicated region
    $region50: #{tpu_custom_call.1} parent=1 // pred_check
      _
    $region51: #{tpu_custom_call.1} parent=1 // pred_check_branch
      %109 = sbr.rel (0) target = $region53
    $region52: #{tpu_custom_call.1} parent=1 // pred_region
      %110 = dma.done [#allocation9], 256
    $region53: #{tpu_custom_call.1} parent=1 // pred_fallthru
      _
    // Predicated region
    $region54: #{tpu_custom_call.1} parent=1 // pred_check
      _
    $region55: #{tpu_custom_call.1} parent=1 // pred_check_branch
      %112 = sbr.rel (0) target = $region57
    $region56: #{tpu_custom_call.1} parent=1 // pred_region
      %113 = dma.done [#allocation9], 6144
    $region57: #{tpu_custom_call.1} parent=1 // pred_fallthru
      _
    // Predicated region
    $region58: #{tpu_custom_call.1} parent=1 // pred_check
      _
    $region59: #{tpu_custom_call.1} parent=1 // pred_check_branch
      %115 = sbr.rel (0) target = $region61
    $region60: #{tpu_custom_call.1} parent=1 // pred_region
      %116 = dma.done [#allocation12], 4096
    $region61: #{tpu_custom_call.1} parent=1 // pred_fallthru
      _
    %v118 = vld [vmem:[#allocation2] sm:$0xff]
    %v119 = vld [vmem:[#allocation2 + $0x8] sm:$0xff]
    %v120 = vpack.c.bf16 %v119, %v118
    %v121 = vld [vmem:[#allocation8] sm:$0xf]
    %v122 = vld [vmem:[#allocation8 + $0x4] sm:$0xf]
    %v123 = vld [vmem:[#allocation8 + $0x8] sm:$0xf]
    %v124 = vld [vmem:[#allocation8 + $0xc] sm:$0xf]
    %v125 = vld [vmem:[%s4] sm:$0x1]
    %v127 = vlaneseq
    %v128 = vshrl.u32 %v127, 7
    %v129 = vsub.s32 0, %v128
    %v130 = vrot.slane %v125, %v129
    %v136 = vunpack.c.l.b16 %v121
    %v137 = vunpack.c.l.b16 %v122
    %v138 = vunpack.c.l.b16 %v123
    %v139 = vunpack.c.l.b16 %v124
    %v140 = vpack.c.b16 %v137, %v136
    %v141 = vpack.c.b16 %v139, %v138
    %vm144 = vcmask 261120
    %v146 = vsel %vm144, %v120, 0
    %148 = vmatprep.subr.bf16.mxu0 0
    %149 = vmatpush1.bf16.msra.mxu0 %v140
    %150 = vmatprep.subr.bf16.mxu0 0
    %151 = vmatpush1.bf16.msra.mxu0 %v141
    %152 = vmatprep.subr.bf16.mxu0 0
    %153 = vmatpush1.bf16.msra.mxu0 0
    %154 = vmatprep.subr.bf16.mxu0 0
    %155 = vmatpush1.bf16.msra.mxu0 0
    %156 = vmatprep.subr.bf16.mxu0 0
    %157 = vmatpush1.bf16.msra.mxu0 0
    %158 = vmatprep.subr.bf16.mxu0 0
    %159 = vmatpush1.bf16.msra.mxu0 0
    %160 = vmatprep.subr.bf16.mxu0 0
    %161 = vmatpush1.bf16.msra.mxu0 0
    %162 = vmatprep.subr.bf16.mxu0 0
    %163 = vmatpush1.bf16.msra.mxu0 0
    %164 = vmatprep.subr.bf16.mxu0 0
    %165 = vmatpush1.bf16.msra.mxu0 0
    %166 = vmatprep.subr.bf16.mxu0 0
    %167 = vmatpush1.bf16.msra.mxu0 0
    %168 = vmatprep.subr.bf16.mxu0 0
    %169 = vmatpush1.bf16.msra.mxu0 0
    %170 = vmatprep.subr.bf16.mxu0 0
    %171 = vmatpush1.bf16.msra.mxu0 0
    %172 = vmatprep.subr.bf16.mxu0 0
    %173 = vmatpush1.bf16.msra.mxu0 0
    %174 = vmatprep.subr.bf16.mxu0 0
    %175 = vmatpush1.bf16.msra.mxu0 0
    %176 = vmatprep.subr.bf16.mxu0 0
    %177 = vmatpush1.bf16.msra.mxu0 0
    %178 = vmatprep.subr.bf16.mxu0 0
    %179 = vmatpush1.bf16.msra.mxu0 0
    %180 = vmatprep.mubr.bf16.mxu0 0
    %181 = vmatmul.mubr.bf16.gmra.mrb[0].mxu0 %v146
    %v182 = vpop.f32.mrb[0].mxu0
    %v183 = vadd.f32 %v130, %v182
    %v184 = vpop.f32.mrb[0].mxu0
    %v185 = vpop.f32.mrb[0].mxu0
    %v186 = vadd.f32 %v130, %v185
    %v187 = vpop.f32.mrb[0].mxu0
    %188 = vdwg.mxu0
    %v189 = vmax.f32 %v183, 0.0
    %v190 = vmax.f32 %v186, 0.0
    %v191 = vld [vmem:[#allocation5] sm:$0xff]
    %v192 = vld [vmem:[#allocation5 + $0x8] sm:$0xff]
    %v193 = vpack.c.bf16 %v192, %v191
    %v195 = vsel %vm144, %v193, 0
    %197 = vmatprep.subr.bf16.mxu0 0
    %198 = vmatpush1.bf16.msra.mxu0 %v140
    %199 = vmatprep.subr.bf16.mxu0 0
    %200 = vmatpush1.bf16.msra.mxu0 %v141
    %201 = vmatprep.subr.bf16.mxu0 0
    %202 = vmatpush1.bf16.msra.mxu0 0
    %203 = vmatprep.subr.bf16.mxu0 0
    %204 = vmatpush1.bf16.msra.mxu0 0
    %205 = vmatprep.subr.bf16.mxu0 0
    %206 = vmatpush1.bf16.msra.mxu0 0
    %207 = vmatprep.subr.bf16.mxu0 0
    %208 = vmatpush1.bf16.msra.mxu0 0
    %209 = vmatprep.subr.bf16.mxu0 0
    %210 = vmatpush1.bf16.msra.mxu0 0
    %211 = vmatprep.subr.bf16.mxu0 0
    %212 = vmatpush1.bf16.msra.mxu0 0
    %213 = vmatprep.subr.bf16.mxu0 0
    %214 = vmatpush1.bf16.msra.mxu0 0
    %215 = vmatprep.subr.bf16.mxu0 0
    %216 = vmatpush1.bf16.msra.mxu0 0
    %217 = vmatprep.subr.bf16.mxu0 0
    %218 = vmatpush1.bf16.msra.mxu0 0
    %219 = vmatprep.subr.bf16.mxu0 0
    %220 = vmatpush1.bf16.msra.mxu0 0
    %221 = vmatprep.subr.bf16.mxu0 0
    %222 = vmatpush1.bf16.msra.mxu0 0
    %223 = vmatprep.subr.bf16.mxu0 0
    %224 = vmatpush1.bf16.msra.mxu0 0
    %225 = vmatprep.subr.bf16.mxu0 0
    %226 = vmatpush1.bf16.msra.mxu0 0
    %227 = vmatprep.subr.bf16.mxu0 0
    %228 = vmatpush1.bf16.msra.mxu0 0
    %229 = vmatprep.mubr.bf16.mxu0 0
    %230 = vmatmul.mubr.bf16.gmra.mrb[0].mxu0 %v195
    %v231 = vpop.f32.mrb[0].mxu0
    %v232 = vadd.f32 %v130, %v231
    %v233 = vpop.f32.mrb[0].mxu0
    %v234 = vpop.f32.mrb[0].mxu0
    %v235 = vadd.f32 %v130, %v234
    %v236 = vpop.f32.mrb[0].mxu0
    %237 = vdwg.mxu0
    %v238 = vmax.f32 %v232, 0.0
    %v239 = vmax.f32 %v235, 0.0
    %v240 = vpack.c.bf16 %v190, %v189
    %v241 = vld [vmem:[#allocation7] sm:$0xf]
    %v242 = vld [vmem:[#allocation7 + $0x4] sm:$0xf]
    %v243 = vpack.c.bf16 %v239, %v238
    %v246 = vunpack.c.l.b16 %v241
    %v247 = vunpack.c.l.b16 %v242
    %v248 = vpack.c.b16 %v247, %v246
    %v250 = vld [vmem:[#allocation10] sm:$0xff]
    %v251 = vld [vmem:[#allocation10 + $0x8] sm:$0xff]
    %v252 = vld [vmem:[#allocation10 + $0x10] sm:$0xff]
    %v253 = vld [vmem:[#allocation10 + $0x18] sm:$0xff]
    %v254 = vld [vmem:[#allocation10 + $0x20] sm:$0xff]
    %v255 = vld [vmem:[#allocation10 + $0x28] sm:$0xff]
    %v256 = vld [vmem:[#allocation10 + $0x30] sm:$0xff]
    %v257 = vld [vmem:[#allocation10 + $0x38] sm:$0xff]
    %v258 = vld [vmem:[#allocation10 + $0x40] sm:$0xff]
    %v259 = vld [vmem:[#allocation10 + $0x48] sm:$0xff]
    %v260 = vld [vmem:[#allocation10 + $0x50] sm:$0xff]
    %v261 = vld [vmem:[#allocation10 + $0x58] sm:$0xff]
    %v262 = vld [vmem:[#allocation10 + $0x60] sm:$0xff]
    %v263 = vld [vmem:[#allocation10 + $0x68] sm:$0xff]
    %v264 = vld [vmem:[#allocation10 + $0x70] sm:$0xff]
    %v265 = vld [vmem:[#allocation10 + $0x78] sm:$0xff]
    %v266 = vld [vmem:[#allocation10 + $0x80] sm:$0xff]
    %v267 = vld [vmem:[#allocation10 + $0x88] sm:$0xff]
    %v268 = vld [vmem:[#allocation10 + $0x90] sm:$0xff]
    %v269 = vld [vmem:[#allocation10 + $0x98] sm:$0xff]
    %v270 = vld [vmem:[#allocation10 + $0xa0] sm:$0xff]
    %v271 = vld [vmem:[#allocation10 + $0xa8] sm:$0xff]
    %v272 = vld [vmem:[#allocation10 + $0xb0] sm:$0xff]
    %v273 = vld [vmem:[#allocation10 + $0xb8] sm:$0xff]
    %v274 = vld [vmem:[#allocation10 + $0xc0] sm:$0xff]
    %v275 = vld [vmem:[#allocation10 + $0xc8] sm:$0xff]
    %v276 = vld [vmem:[#allocation10 + $0xd0] sm:$0xff]
    %v277 = vld [vmem:[#allocation10 + $0xd8] sm:$0xff]
    %v278 = vld [vmem:[#allocation10 + $0xe0] sm:$0xff]
    %v279 = vld [vmem:[#allocation10 + $0xe8] sm:$0xff]
    %v280 = vld [vmem:[#allocation10 + $0xf0] sm:$0xff]
    %v281 = vld [vmem:[#allocation10 + $0xf8] sm:$0xff]
    %v282 = vld [vmem:[#allocation10 + $0x100] sm:$0xff]
    %v283 = vld [vmem:[#allocation10 + $0x108] sm:$0xff]
    %v284 = vld [vmem:[#allocation10 + $0x110] sm:$0xff]
    %v285 = vld [vmem:[#allocation10 + $0x118] sm:$0xff]
    %v286 = vld [vmem:[#allocation10 + $0x120] sm:$0xff]
    %v287 = vld [vmem:[#allocation10 + $0x128] sm:$0xff]
    %v288 = vld [vmem:[#allocation10 + $0x130] sm:$0xff]
    %v289 = vld [vmem:[#allocation10 + $0x138] sm:$0xff]
    %v290 = vld [vmem:[#allocation10 + $0x140] sm:$0xff]
    %v291 = vld [vmem:[#allocation10 + $0x148] sm:$0xff]
    %v292 = vld [vmem:[#allocation10 + $0x150] sm:$0xff]
    %v293 = vld [vmem:[#allocation10 + $0x158] sm:$0xff]
    %v294 = vld [vmem:[#allocation10 + $0x160] sm:$0xff]
    %v295 = vld [vmem:[#allocation10 + $0x168] sm:$0xff]
    %v296 = vld [vmem:[#allocation10 + $0x170] sm:$0xff]
    %v297 = vld [vmem:[#allocation10 + $0x178] sm:$0xff]
    %v298 = vld [vmem:[%s6] sm:$0x3]
    %v300 = vlaneseq
    %v301 = vshrl.u32 %v300, 7
    %v302 = vsub.s32 0, %v301
    %v303 = vrot.slane %v298, %v302
    %v304 = vlaneseq
    %v305 = vshrl.u32 %v304, 7
    %v306 = vsub.s32 1, %v305
    %v307 = vrot.slane %v298, %v306
    %v358 = vunpack.c.l.b16 %v250
    %v359 = vunpack.c.h.b16 %v250
    %v360 = vunpack.c.l.b16 %v251
    %v361 = vunpack.c.h.b16 %v251
    %v362 = vunpack.c.l.b16 %v252
    %v363 = vunpack.c.h.b16 %v252
    %v364 = vunpack.c.l.b16 %v253
    %v365 = vunpack.c.h.b16 %v253
    %v366 = vunpack.c.l.b16 %v254
    %v367 = vunpack.c.h.b16 %v254
    %v368 = vunpack.c.l.b16 %v255
    %v369 = vunpack.c.h.b16 %v255
    %v370 = vunpack.c.l.b16 %v256
    %v371 = vunpack.c.h.b16 %v256
    %v372 = vunpack.c.l.b16 %v257
    %v373 = vunpack.c.h.b16 %v257
    %v374 = vunpack.c.l.b16 %v258
    %v375 = vunpack.c.h.b16 %v258
    %v376 = vunpack.c.l.b16 %v259
    %v377 = vunpack.c.h.b16 %v259
    %v378 = vunpack.c.l.b16 %v260
    %v379 = vunpack.c.h.b16 %v260
    %v380 = vunpack.c.l.b16 %v261
    %v381 = vunpack.c.h.b16 %v261
    %v382 = vunpack.c.l.b16 %v262
    %v383 = vunpack.c.h.b16 %v262
    %v384 = vunpack.c.l.b16 %v263
    %v385 = vunpack.c.h.b16 %v263
    %v386 = vunpack.c.l.b16 %v264
    %v387 = vunpack.c.h.b16 %v264
    %v388 = vunpack.c.l.b16 %v265
    %v389 = vunpack.c.h.b16 %v265
    %v390 = vunpack.c.l.b16 %v266
    %v391 = vunpack.c.h.b16 %v266
    %v392 = vunpack.c.l.b16 %v267
    %v393 = vunpack.c.h.b16 %v267
    %v394 = vunpack.c.l.b16 %v268
    %v395 = vunpack.c.h.b16 %v268
    %v396 = vunpack.c.l.b16 %v269
    %v397 = vunpack.c.h.b16 %v269
    %v398 = vunpack.c.l.b16 %v270
    %v399 = vunpack.c.h.b16 %v270
    %v400 = vunpack.c.l.b16 %v271
    %v401 = vunpack.c.h.b16 %v271
    %v402 = vunpack.c.l.b16 %v272
    %v403 = vunpack.c.h.b16 %v272
    %v404 = vunpack.c.l.b16 %v273
    %v405 = vunpack.c.h.b16 %v273
    %v406 = vunpack.c.l.b16 %v274
    %v407 = vunpack.c.h.b16 %v274
    %v408 = vunpack.c.l.b16 %v275
    %v409 = vunpack.c.h.b16 %v275
    %v410 = vunpack.c.l.b16 %v276
    %v411 = vunpack.c.h.b16 %v276
    %v412 = vunpack.c.l.b16 %v277
    %v413 = vunpack.c.h.b16 %v277
    %v414 = vunpack.c.l.b16 %v278
    %v415 = vunpack.c.h.b16 %v278
    %v416 = vunpack.c.l.b16 %v279
    %v417 = vunpack.c.h.b16 %v279
    %v418 = vunpack.c.l.b16 %v280
    %v419 = vunpack.c.h.b16 %v280
    %v420 = vunpack.c.l.b16 %v281
    %v421 = vunpack.c.h.b16 %v281
    %v422 = vunpack.c.l.b16 %v282
    %v423 = vunpack.c.h.b16 %v282
    %v424 = vunpack.c.l.b16 %v283
    %v425 = vunpack.c.h.b16 %v283
    %v426 = vunpack.c.l.b16 %v284
    %v427 = vunpack.c.h.b16 %v284
    %v428 = vunpack.c.l.b16 %v285
    %v429 = vunpack.c.h.b16 %v285
    %v430 = vunpack.c.l.b16 %v286
    %v431 = vunpack.c.h.b16 %v286
    %v432 = vunpack.c.l.b16 %v287
    %v433 = vunpack.c.h.b16 %v287
    %v434 = vunpack.c.l.b16 %v288
    %v435 = vunpack.c.h.b16 %v288
    %v436 = vunpack.c.l.b16 %v289
    %v437 = vunpack.c.h.b16 %v289
    %v438 = vunpack.c.l.b16 %v290
    %v439 = vunpack.c.h.b16 %v290
    %v440 = vunpack.c.l.b16 %v291
    %v441 = vunpack.c.h.b16 %v291
    %v442 = vunpack.c.l.b16 %v292
    %v443 = vunpack.c.h.b16 %v292
    %v444 = vunpack.c.l.b16 %v293
    %v445 = vunpack.c.h.b16 %v293
    %v446 = vunpack.c.l.b16 %v294
    %v447 = vunpack.c.h.b16 %v294
    %v448 = vunpack.c.l.b16 %v295
    %v449 = vunpack.c.h.b16 %v295
    %v450 = vunpack.c.l.b16 %v296
    %v451 = vunpack.c.h.b16 %v296
    %v452 = vunpack.c.l.b16 %v297
    %v453 = vunpack.c.h.b16 %v297
    %v454 = vpack.c.b16 %v360, %v358
    %v455 = vpack.c.b16 %v361, %v359
    %v456 = vpack.c.b16 %v364, %v362
    %v457 = vpack.c.b16 %v365, %v363
    %v458 = vpack.c.b16 %v368, %v366
    %v459 = vpack.c.b16 %v369, %v367
    %v460 = vpack.c.b16 %v372, %v370
    %v461 = vpack.c.b16 %v373, %v371
    %v462 = vpack.c.b16 %v376, %v374
    %v463 = vpack.c.b16 %v377, %v375
    %v464 = vpack.c.b16 %v380, %v378
    %v465 = vpack.c.b16 %v381, %v379
    %v466 = vpack.c.b16 %v384, %v382
    %v467 = vpack.c.b16 %v385, %v383
    %v468 = vpack.c.b16 %v388, %v386
    %v469 = vpack.c.b16 %v389, %v387
    %v470 = vpack.c.b16 %v392, %v390
    %v471 = vpack.c.b16 %v393, %v391
    %v472 = vpack.c.b16 %v396, %v394
    %v473 = vpack.c.b16 %v397, %v395
    %v474 = vpack.c.b16 %v400, %v398
    %v475 = vpack.c.b16 %v401, %v399
    %v476 = vpack.c.b16 %v404, %v402
    %v477 = vpack.c.b16 %v405, %v403
    %v478 = vpack.c.b16 %v408, %v406
    %v479 = vpack.c.b16 %v409, %v407
    %v480 = vpack.c.b16 %v412, %v410
    %v481 = vpack.c.b16 %v413, %v411
    %v482 = vpack.c.b16 %v416, %v414
    %v483 = vpack.c.b16 %v417, %v415
    %v484 = vpack.c.b16 %v420, %v418
    %v485 = vpack.c.b16 %v421, %v419
    %v486 = vpack.c.b16 %v424, %v422
    %v487 = vpack.c.b16 %v425, %v423
    %v488 = vpack.c.b16 %v428, %v426
    %v489 = vpack.c.b16 %v429, %v427
    %v490 = vpack.c.b16 %v432, %v430
    %v491 = vpack.c.b16 %v433, %v431
    %v492 = vpack.c.b16 %v436, %v434
    %v493 = vpack.c.b16 %v437, %v435
    %v494 = vpack.c.b16 %v440, %v438
    %v495 = vpack.c.b16 %v441, %v439
    %v496 = vpack.c.b16 %v444, %v442
    %v497 = vpack.c.b16 %v445, %v443
    %v498 = vpack.c.b16 %v448, %v446
    %v499 = vpack.c.b16 %v449, %v447
    %v500 = vpack.c.b16 %v452, %v450
    %v501 = vpack.c.b16 %v453, %v451
    %550 = vmatprep.subr.bf16.mxu0 %v455
    %551 = vmatpush1.bf16.msra.mxu0 %v454
    %552 = vmatprep.subr.bf16.mxu0 %v457
    %553 = vmatpush1.bf16.msra.mxu0 %v456
    %554 = vmatprep.subr.bf16.mxu0 %v459
    %555 = vmatpush1.bf16.msra.mxu0 %v458
    %556 = vmatprep.subr.bf16.mxu0 %v461
    %557 = vmatpush1.bf16.msra.mxu0 %v460
    %558 = vmatprep.subr.bf16.mxu0 %v463
    %559 = vmatpush1.bf16.msra.mxu0 %v462
    %560 = vmatprep.subr.bf16.mxu0 %v465
    %561 = vmatpush1.bf16.msra.mxu0 %v464
    %562 = vmatprep.subr.bf16.mxu0 %v467
    %563 = vmatpush1.bf16.msra.mxu0 %v466
    %564 = vmatprep.subr.bf16.mxu0 %v469
    %565 = vmatpush1.bf16.msra.mxu0 %v468
    %566 = vmatprep.subr.bf16.mxu0 %v471
    %567 = vmatpush1.bf16.msra.mxu0 %v470
    %568 = vmatprep.subr.bf16.mxu0 %v473
    %569 = vmatpush1.bf16.msra.mxu0 %v472
    %570 = vmatprep.subr.bf16.mxu0 %v475
    %571 = vmatpush1.bf16.msra.mxu0 %v474
    %572 = vmatprep.subr.bf16.mxu0 %v477
    %573 = vmatpush1.bf16.msra.mxu0 %v476
    %574 = vmatprep.subr.bf16.mxu0 %v479
    %575 = vmatpush1.bf16.msra.mxu0 %v478
    %576 = vmatprep.subr.bf16.mxu0 %v481
    %577 = vmatpush1.bf16.msra.mxu0 %v480
    %578 = vmatprep.subr.bf16.mxu0 %v483
    %579 = vmatpush1.bf16.msra.mxu0 %v482
    %580 = vmatprep.subr.bf16.mxu0 %v485
    %581 = vmatpush1.bf16.msra.mxu0 %v484
    %582 = vmatprep.mubr.bf16.mxu0 %v248
    %583 = vmatmul.mubr.bf16.gmra.mrb[0].mxu0 %v240
    %v584 = vpop.f32.mrb[0].mxu0
    %v585 = vadd.f32 %v303, %v584
    %v586 = vpop.f32.mrb[0].mxu0
    %v587 = vadd.f32 %v307, %v586
    %v588 = vpop.f32.mrb[0].mxu0
    %v589 = vadd.f32 %v303, %v588
    %v590 = vpop.f32.mrb[0].mxu0
    %v591 = vadd.f32 %v307, %v590
    %592 = vdwg.mxu0
    %593 = vmatprep.subr.bf16.mxu0 %v487
    %594 = vmatpush1.bf16.msra.mxu0 %v486
    %595 = vmatprep.subr.bf16.mxu0 %v489
    %596 = vmatpush1.bf16.msra.mxu0 %v488
    %597 = vmatprep.subr.bf16.mxu0 %v491
    %598 = vmatpush1.bf16.msra.mxu0 %v490
    %599 = vmatprep.subr.bf16.mxu0 %v493
    %600 = vmatpush1.bf16.msra.mxu0 %v492
    %601 = vmatprep.subr.bf16.mxu0 %v495
    %602 = vmatpush1.bf16.msra.mxu0 %v494
    %603 = vmatprep.subr.bf16.mxu0 %v497
    %604 = vmatpush1.bf16.msra.mxu0 %v496
    %605 = vmatprep.subr.bf16.mxu0 %v499
    %606 = vmatpush1.bf16.msra.mxu0 %v498
    %607 = vmatprep.subr.bf16.mxu0 %v501
    %608 = vmatpush1.bf16.msra.mxu0 %v500
    %609 = vmatprep.subr.bf16.mxu0 0
    %610 = vmatpush1.bf16.msra.mxu0 0
    %611 = vmatprep.subr.bf16.mxu0 0
    %612 = vmatpush1.bf16.msra.mxu0 0
    %613 = vmatprep.subr.bf16.mxu0 0
    %614 = vmatpush1.bf16.msra.mxu0 0
    %615 = vmatprep.subr.bf16.mxu0 0
    %616 = vmatpush1.bf16.msra.mxu0 0
    %617 = vmatprep.subr.bf16.mxu0 0
    %618 = vmatpush1.bf16.msra.mxu0 0
    %619 = vmatprep.subr.bf16.mxu0 0
    %620 = vmatpush1.bf16.msra.mxu0 0
    %621 = vmatprep.subr.bf16.mxu0 0
    %622 = vmatpush1.bf16.msra.mxu0 0
    %623 = vmatprep.subr.bf16.mxu0 0
    %624 = vmatpush1.bf16.msra.mxu0 0
    %625 = vmatprep.mubr.bf16.mxu0 0
    %626 = vmatmul.mubr.bf16.gmra.mrb[0].mxu0 %v243
    %v627 = vpop.f32.mrb[0].mxu0
    %v628 = vadd.f32 %v585, %v627
    %v629 = vpop.f32.mrb[0].mxu0
    %v630 = vadd.f32 %v587, %v629
    %v631 = vpop.f32.mrb[0].mxu0
    %v632 = vadd.f32 %v589, %v631
    %v633 = vpop.f32.mrb[0].mxu0
    %v634 = vadd.f32 %v591, %v633
    %635 = vdwg.mxu0
    %v636 = vmax.f32 %v628, 0.0
    %v637 = vmax.f32 %v630, 0.0
    %v638 = vmax.f32 %v632, 0.0
    %v639 = vmax.f32 %v634, 0.0
    %v640 = vpack.c.bf16 %v638, %v636
    %v641 = vpack.c.bf16 %v639, %v637
    %v642 = vld [vmem:[#allocation11] sm:$0xff]
    %v643 = vld [vmem:[#allocation11 + $0x8] sm:$0xff]
    %v644 = vld [vmem:[#allocation11 + $0x10] sm:$0xff]
    %v645 = vld [vmem:[#allocation11 + $0x18] sm:$0xff]
    %v646 = vld [vmem:[#allocation11 + $0x20] sm:$0xff]
    %v647 = vld [vmem:[#allocation11 + $0x28] sm:$0xff]
    %v648 = vld [vmem:[#allocation11 + $0x30] sm:$0xff]
    %v649 = vld [vmem:[#allocation11 + $0x38] sm:$0xff]
    %v650 = vld [vmem:[#allocation11 + $0x40] sm:$0xff]
    %v651 = vld [vmem:[#allocation11 + $0x48] sm:$0xff]
    %v652 = vld [vmem:[#allocation11 + $0x50] sm:$0xff]
    %v653 = vld [vmem:[#allocation11 + $0x58] sm:$0xff]
    %v654 = vld [vmem:[#allocation11 + $0x60] sm:$0xff]
    %v655 = vld [vmem:[#allocation11 + $0x68] sm:$0xff]
    %v656 = vld [vmem:[#allocation11 + $0x70] sm:$0xff]
    %v657 = vld [vmem:[#allocation11 + $0x78] sm:$0xff]
    %v658 = vld [vmem:[#allocation11 + $0x80] sm:$0xff]
    %v659 = vld [vmem:[#allocation11 + $0x88] sm:$0xff]
    %v660 = vld [vmem:[#allocation11 + $0x90] sm:$0xff]
    %v661 = vld [vmem:[#allocation11 + $0x98] sm:$0xff]
    %v662 = vld [vmem:[#allocation11 + $0xa0] sm:$0xff]
    %v663 = vld [vmem:[#allocation11 + $0xa8] sm:$0xff]
    %v664 = vld [vmem:[#allocation11 + $0xb0] sm:$0xff]
    %v665 = vld [vmem:[#allocation11 + $0xb8] sm:$0xff]
    %v666 = vld [vmem:[#allocation11 + $0xc0] sm:$0xff]
    %v667 = vld [vmem:[#allocation11 + $0xc8] sm:$0xff]
    %v668 = vld [vmem:[#allocation11 + $0xd0] sm:$0xff]
    %v669 = vld [vmem:[#allocation11 + $0xd8] sm:$0xff]
    %v670 = vld [vmem:[#allocation11 + $0xe0] sm:$0xff]
    %v671 = vld [vmem:[#allocation11 + $0xe8] sm:$0xff]
    %v672 = vld [vmem:[#allocation11 + $0xf0] sm:$0xff]
    %v673 = vld [vmem:[#allocation11 + $0xf8] sm:$0xff]
    %v674 = vld [vmem:[%s8] sm:$0x3]
    %v676 = vlaneseq
    %v677 = vshrl.u32 %v676, 7
    %v678 = vsub.s32 0, %v677
    %v679 = vrot.slane %v674, %v678
    %v680 = vlaneseq
    %v681 = vshrl.u32 %v680, 7
    %v682 = vsub.s32 1, %v681
    %v683 = vrot.slane %v674, %v682
    %v718 = vunpack.c.l.b16 %v642
    %v719 = vunpack.c.h.b16 %v642
    %v720 = vunpack.c.l.b16 %v643
    %v721 = vunpack.c.h.b16 %v643
    %v722 = vunpack.c.l.b16 %v644
    %v723 = vunpack.c.h.b16 %v644
    %v724 = vunpack.c.l.b16 %v645
    %v725 = vunpack.c.h.b16 %v645
    %v726 = vunpack.c.l.b16 %v646
    %v727 = vunpack.c.h.b16 %v646
    %v728 = vunpack.c.l.b16 %v647
    %v729 = vunpack.c.h.b16 %v647
    %v730 = vunpack.c.l.b16 %v648
    %v731 = vunpack.c.h.b16 %v648
    %v732 = vunpack.c.l.b16 %v649
    %v733 = vunpack.c.h.b16 %v649
    %v734 = vunpack.c.l.b16 %v650
    %v735 = vunpack.c.h.b16 %v650
    %v736 = vunpack.c.l.b16 %v651
    %v737 = vunpack.c.h.b16 %v651
    %v738 = vunpack.c.l.b16 %v652
    %v739 = vunpack.c.h.b16 %v652
    %v740 = vunpack.c.l.b16 %v653
    %v741 = vunpack.c.h.b16 %v653
    %v742 = vunpack.c.l.b16 %v654
    %v743 = vunpack.c.h.b16 %v654
    %v744 = vunpack.c.l.b16 %v655
    %v745 = vunpack.c.h.b16 %v655
    %v746 = vunpack.c.l.b16 %v656
    %v747 = vunpack.c.h.b16 %v656
    %v748 = vunpack.c.l.b16 %v657
    %v749 = vunpack.c.h.b16 %v657
    %v750 = vunpack.c.l.b16 %v658
    %v751 = vunpack.c.h.b16 %v658
    %v752 = vunpack.c.l.b16 %v659
    %v753 = vunpack.c.h.b16 %v659
    %v754 = vunpack.c.l.b16 %v660
    %v755 = vunpack.c.h.b16 %v660
    %v756 = vunpack.c.l.b16 %v661
    %v757 = vunpack.c.h.b16 %v661
    %v758 = vunpack.c.l.b16 %v662
    %v759 = vunpack.c.h.b16 %v662
    %v760 = vunpack.c.l.b16 %v663
    %v761 = vunpack.c.h.b16 %v663
    %v762 = vunpack.c.l.b16 %v664
    %v763 = vunpack.c.h.b16 %v664
    %v764 = vunpack.c.l.b16 %v665
    %v765 = vunpack.c.h.b16 %v665
    %v766 = vunpack.c.l.b16 %v666
    %v767 = vunpack.c.h.b16 %v666
    %v768 = vunpack.c.l.b16 %v667
    %v769 = vunpack.c.h.b16 %v667
    %v770 = vunpack.c.l.b16 %v668
    %v771 = vunpack.c.h.b16 %v668
    %v772 = vunpack.c.l.b16 %v669
    %v773 = vunpack.c.h.b16 %v669
    %v774 = vunpack.c.l.b16 %v670
    %v775 = vunpack.c.h.b16 %v670
    %v776 = vunpack.c.l.b16 %v671
    %v777 = vunpack.c.h.b16 %v671
    %v778 = vunpack.c.l.b16 %v672
    %v779 = vunpack.c.h.b16 %v672
    %v780 = vunpack.c.l.b16 %v673
    %v781 = vunpack.c.h.b16 %v673
    %v782 = vpack.c.b16 %v720, %v718
    %v783 = vpack.c.b16 %v721, %v719
    %v784 = vpack.c.b16 %v724, %v722
    %v785 = vpack.c.b16 %v725, %v723
    %v786 = vpack.c.b16 %v728, %v726
    %v787 = vpack.c.b16 %v729, %v727
    %v788 = vpack.c.b16 %v732, %v730
    %v789 = vpack.c.b16 %v733, %v731
    %v790 = vpack.c.b16 %v736, %v734
    %v791 = vpack.c.b16 %v737, %v735
    %v792 = vpack.c.b16 %v740, %v738
    %v793 = vpack.c.b16 %v741, %v739
    %v794 = vpack.c.b16 %v744, %v742
    %v795 = vpack.c.b16 %v745, %v743
    %v796 = vpack.c.b16 %v748, %v746
    %v797 = vpack.c.b16 %v749, %v747
    %v798 = vpack.c.b16 %v752, %v750
    %v799 = vpack.c.b16 %v753, %v751
    %v800 = vpack.c.b16 %v756, %v754
    %v801 = vpack.c.b16 %v757, %v755
    %v802 = vpack.c.b16 %v760, %v758
    %v803 = vpack.c.b16 %v761, %v759
    %v804 = vpack.c.b16 %v764, %v762
    %v805 = vpack.c.b16 %v765, %v763
    %v806 = vpack.c.b16 %v768, %v766
    %v807 = vpack.c.b16 %v769, %v767
    %v808 = vpack.c.b16 %v772, %v770
    %v809 = vpack.c.b16 %v773, %v771
    %v810 = vpack.c.b16 %v776, %v774
    %v811 = vpack.c.b16 %v777, %v775
    %v812 = vpack.c.b16 %v780, %v778
    %v813 = vpack.c.b16 %v781, %v779
    %846 = vmatprep.subr.bf16.mxu0 %v783
    %847 = vmatpush1.bf16.msra.mxu0 %v782
    %848 = vmatprep.subr.bf16.mxu0 %v785
    %849 = vmatpush1.bf16.msra.mxu0 %v784
    %850 = vmatprep.subr.bf16.mxu0 %v787
    %851 = vmatpush1.bf16.msra.mxu0 %v786
    %852 = vmatprep.subr.bf16.mxu0 %v789
    %853 = vmatpush1.bf16.msra.mxu0 %v788
    %854 = vmatprep.subr.bf16.mxu0 %v791
    %855 = vmatpush1.bf16.msra.mxu0 %v790
    %856 = vmatprep.subr.bf16.mxu0 %v793
    %857 = vmatpush1.bf16.msra.mxu0 %v792
    %858 = vmatprep.subr.bf16.mxu0 %v795
    %859 = vmatpush1.bf16.msra.mxu0 %v794
    %860 = vmatprep.subr.bf16.mxu0 %v797
    %861 = vmatpush1.bf16.msra.mxu0 %v796
    %862 = vmatprep.subr.bf16.mxu0 %v799
    %863 = vmatpush1.bf16.msra.mxu0 %v798
    %864 = vmatprep.subr.bf16.mxu0 %v801
    %865 = vmatpush1.bf16.msra.mxu0 %v800
    %866 = vmatprep.subr.bf16.mxu0 %v803
    %867 = vmatpush1.bf16.msra.mxu0 %v802
    %868 = vmatprep.subr.bf16.mxu0 %v805
    %869 = vmatpush1.bf16.msra.mxu0 %v804
    %870 = vmatprep.subr.bf16.mxu0 %v807
    %871 = vmatpush1.bf16.msra.mxu0 %v806
    %872 = vmatprep.subr.bf16.mxu0 %v809
    %873 = vmatpush1.bf16.msra.mxu0 %v808
    %874 = vmatprep.subr.bf16.mxu0 %v811
    %875 = vmatpush1.bf16.msra.mxu0 %v810
    %876 = vmatprep.subr.bf16.mxu0 %v813
    %877 = vmatpush1.bf16.msra.mxu0 %v812
    %878 = vmatprep.mubr.bf16.mxu0 %v641
    %879 = vmatmul.mubr.bf16.gmra.mrb[0].mxu0 %v640
    %v880 = vpop.f32.mrb[0].mxu0
    %v881 = vadd.f32 %v679, %v880
    %v882 = vpop.f32.mrb[0].mxu0
    %v883 = vadd.f32 %v683, %v882
    %v884 = vpop.f32.mrb[0].mxu0
    %v885 = vadd.f32 %v679, %v884
    %v886 = vpop.f32.mrb[0].mxu0
    %v887 = vadd.f32 %v683, %v886
    %888 = vdwg.mxu0
    %889 = vst [vmem:[#allocation13] sm:$0xff] %v881
    %890 = vst [vmem:[#allocation13 + $0x8] sm:$0xff] %v883
    %891 = vst [vmem:[#allocation13 + $0x10] sm:$0xff] %v885
    %892 = vst [vmem:[#allocation13 + $0x18] sm:$0xff] %v887
    %s893 = smul.u32 0, 16
    %v894 = vlaneseq
    %v895 = vshrl.u32 %v894, 7
    %v896 = vadd.s32 %v895, 8
    %v897 = vstv %s893
    %v898 = vadd.s32 %v897, %v895
    %v899 = vadd.s32 %v897, %v896
    %vm900 = vcmp.lt.s32.totalorder %v898, 8
    %vm901 = vcmp.lt.s32.totalorder %v899, 8
    %v902 = vsel %vm900, 1, 0
    %v903 = vsel %vm901, 1, 0
    %v904 = vcvt.s32.f32 %v902
    %v905 = vcvt.s32.f32 %v903
    %v906 = vsub.f32 %v881, %v238
    %v907 = vsub.f32 %v885, %v239
    %v908 = vmul.f32 %v906, %v906
    %v909 = vmul.f32 %v907, %v907
    %910 = vadd.xlane.f32.xlu0 %v908
    %v911 = vpop.xlane.xlu0 %910
    %912 = vadd.xlane.f32.xlu0 %v909
    %v913 = vpop.xlane.xlu0 %912
    %v914 = vmul.f32 %v911, %v904
    %v915 = vmul.f32 %v913, %v905
    %vm916 = vcmask 7168
    %917 = vst.msk [vmem:[%s10] sm:$0xff] %vm916, %v914
    %918 = vst.msk [vmem:[%s10 + $0x8] sm:$0xff] %vm916, %v915
    // Predicated region
    $region62: #{tpu_custom_call.1} parent=1 // pred_check
      _
    $region63: #{tpu_custom_call.1} parent=1 // pred_check_branch
      %920 = sbr.rel (0) target = $region65
    $region64: #{tpu_custom_call.1} parent=1 // pred_region
      %s922 = ssub.s32 512, 512
      %923 = vsyncadd [#allocation4], %s922
      %s924 = sshll.u32 [#allocation13], 4
      %s925 = int_to_ptr.vmem [resolvable:$true] %s924
      %930 = dma.vmem_to_hbm [thread:$0]  %s925, 512, %s9, [#allocation4], 256, 256, 16
    $region65: #{tpu_custom_call.1} parent=1 // pred_fallthru
      _
    // Predicated region
    $region66: #{tpu_custom_call.1} parent=1 // pred_check
      _
    $region67: #{tpu_custom_call.1} parent=1 // pred_check_branch
      %932 = sbr.rel (0) target = $region69
    $region68: #{tpu_custom_call.1} parent=1 // pred_region
      _
    $region69: #{tpu_custom_call.1} parent=1 // pred_fallthru
      _
    // Predicated region
    $region70: #{tpu_custom_call.1} parent=1 // pred_check
      _
    $region71: #{tpu_custom_call.1} parent=1 // pred_check_branch
      %934 = sbr.rel (0) target = $region73
    $region72: #{tpu_custom_call.1} parent=1 // pred_region
      %935 = dma.done [#allocation4], 512
    $region73: #{tpu_custom_call.1} parent=1 // pred_fallthru
      _
    // Predicated region
    $region74: #{tpu_custom_call.1} parent=1 // pred_check
      _
    $region75: #{tpu_custom_call.1} parent=1 // pred_check_branch
      %937 = sbr.rel (0) target = $region77
    $region76: #{tpu_custom_call.1} parent=1 // pred_region
      _
    $region77: #{tpu_custom_call.1} parent=1 // pred_fallthru
      _
    %938 = vsyncpa [#allocation3], 1
    %939 = vsyncpa [#allocation6], 1
    %940 = vsyncpa [#allocation9], 1
    %941 = vsyncpa [#allocation12], 1
    %942 = vsyncpa [#allocation4], 1

</llo_original>
